<compile_context>
chip_gen: v6e
topology: v6e:2x2x1
jax: 0.10.0
libtpu: 0.0.40
codegen_flags: <defaults>
</compile_context>

<pallas_src>
import functools
import math

import jax
import jax.numpy as jnp
from jax.experimental import pallas as pl
from jax.experimental.pallas import tpu as pltpu


def _round_up(v, m):
    return ((v + m - 1) // m) * m


# --------------------------------------------------------------------------
# Kernel
# --------------------------------------------------------------------------
def _gcn_kernel(x_ref, adj_ref, w_ref, b_ref, o_ref, *, add_loop):
    tb, n, fa = x_ref.shape
    cp = w_ref.shape[-1]

    x = x_ref[...]                       # (TB, N, Fa) bf16 (last col = corr)
    adj = adj_ref[...]                   # (TB, N, N)  int8 / bf16 / f32

    # Storage dtype is chosen in the wrapper: int8/bf16 for {0,1}-valued
    # adjacencies (the int8 -> bf16 upcast is exact and rides otherwise-idle
    # VPU slots), f32 for weighted adjacencies that must not be rounded.
    if adj_ref.dtype == jnp.float32:
        adj_mm = adj
        act_dtype = jnp.float32
    else:
        adj_mm = adj.astype(jnp.bfloat16)
        act_dtype = jnp.bfloat16

    # x @ W with the batch folded into the MXU M dimension (bf16 x bf16,
    # f32 accumulation).  When add_loop, the last column of x carries
    # corr = loop_value - diag(adj) and the matching row of W is zero, so the
    # product is unaffected by the extra column.
    xw = jnp.dot(x.reshape(tb * n, fa), w_ref[...],
                 preferred_element_type=jnp.float32).reshape(tb, n, cp)

    # Row degrees as an MXU mat-vec with f32 accumulation (exact for {0,1}
    # entries) -- avoids materialising a (TB, N, N) f32 temporary.
    ones = jnp.ones((n, 1), adj_mm.dtype)
    deg = jnp.dot(adj_mm.reshape(tb * n, n), ones,
                  preferred_element_type=jnp.float32).reshape(tb, n, 1)

    if add_loop:
        # Self-loop folded in algebraically (no N x N identity mask):
        #   rowsum(adj_loop) = rowsum(adj) + (v - diag(adj))
        #   adj_loop @ s     = adj @ s + (v - diag(adj)) * s     (row-wise)
        # corr arrives as the last (zero-weight) column of x: a static lane
        # slice gives it in the row-indexed (TB, N, 1) layout directly.
        corr = x[:, :, fa - 1:fa].astype(jnp.float32)            # (TB, N, 1)
        deg = deg + corr

    dinv = jax.lax.rsqrt(jnp.maximum(deg, jnp.float32(1.0)))

    # D^-1/2 A_loop D^-1/2 (XW) == dinv * (A_loop @ (dinv * XW)).
    # A single shared copy of the scaled activations (bf16 on the {0,1} path)
    # feeds BOTH the neighbour matmul and the self-loop term, so diagonal and
    # off-diagonal contributions carry identical rounding.
    scaled = (dinv * xw).astype(act_dtype)                       # (TB, N, Cp)
    agg = jnp.einsum('bij,bjc->bic', adj_mm, scaled,
                     preferred_element_type=jnp.float32)
    if add_loop:
        agg = agg + corr * scaled.astype(jnp.float32)

    o_ref[...] = (dinv * agg + b_ref[...]).astype(o_ref.dtype)


# --------------------------------------------------------------------------
# VMEM sizing / tiling heuristics
# --------------------------------------------------------------------------
def _vmem_capacity_bytes():
    """Per-core VMEM capacity; conservative fallback if the query fails."""
    try:
        info = pltpu.get_tpu_info()
        for name in ("vmem_capacity_bytes", "vmem_size_bytes", "vmem_bytes"):
            v = getattr(info, name, None)
            if v:
                return int(v)
    except Exception:
        pass
    return 64 * 1024 * 1024   # v7x per-TensorCore (smallest current generation)


def _working_set_bytes(tb, N, Fa, Cp, adj_itemsize):
    """Rough per-step VMEM footprint: double-buffered streams + resident
    weights + in-kernel temporaries, with last dims lane-padded to 128."""
    ladj = _round_up(N, 128)
    lx = _round_up(Fa, 128)
    lc = _round_up(Cp, 128)
    adj_block = tb * N * ladj * adj_itemsize
    x_block = tb * N * lx * 2                       # bf16
    out_block = tb * N * lc * 4                     # f32
    resident = Fa * lc * 2 + 8 * lc * 4             # W (bf16) + bias (f32)
    adj_tmp = tb * N * ladj * (2 if adj_itemsize != 2 else 0)   # bf16 upcast
    act_tmp = tb * N * lc * (4 + 4 + 4)             # xw + scaled + agg
    small = tb * N * 128 * 4 * 3                    # deg / corr / dinv columns
    return (2 * (adj_block + x_block + out_block) + 2 * resident
            + adj_tmp + act_tmp + small)


def _pick_batch_tile(B, ws_bytes, adj_block_bytes, budget):
    """Pick a batch tile that (a) fits the VMEM budget, (b) stops growing once
    each adj block is a couple of MiB (per-step overhead is only ~0.35 us),
    and (c) prefers an even grid-step count so v7x's two TensorCores split the
    'parallel' batch axis evenly.  Returns None if even TB=1 does not fit."""
    feas = [d for d in range(1, B + 1) if B % d == 0 and ws_bytes(d) <= budget]
    if not feas:
        return None
    target = 2 << 20
    big = [d for d in feas if adj_block_bytes(d) >= target]
    tb = min(big) if big else max(feas)
    near = [d for d in feas if adj_block_bytes(d) <= 2 * adj_block_bytes(tb)]
    even = [d for d in near if (B // d) % 2 == 0]
    if even:
        tb = min(even, key=lambda d: abs(adj_block_bytes(d) - adj_block_bytes(tb)))
    return tb


# --------------------------------------------------------------------------
# Wrapper
# --------------------------------------------------------------------------
def dense_gcn_conv(x, adj, weight, bias=None, *, add_loop=True, improved=False,
                   mask=None, batch_tile=None, adj_storage_dtype=None,
                   out_channel_multiple=None, adj_buffer_count=None):
    """DenseGCNConv forward.  x: (B,N,F) or (N,F); adj: (B,N,N) or (N,N);
    weight: (F,C); bias: (C,) or None; mask: optional (B,N).  Returns f32
    (B,N,C).

    adj_storage_dtype: HBM stream dtype for the adjacency.
      None (default): int8 if adj is integer/bool typed, else bfloat16; both
      are exact for {0,1} adjacencies (the case in this model), bf16 rounds
      general weighted adjacencies.  Pass jnp.int8 for binary adjacencies
      stored as float (halves the dominant DMA again), or jnp.float32 for
      weighted adjacencies that must not be rounded.
    out_channel_multiple: pad C up to a multiple of this (e.g. 128/256) for
      lane/MXU-dense compute; output is sliced back.  Default None: for this
      full-row blocking the output writeback is already one contiguous DMA,
      so padding tiny C would only add writeback bytes on the HBM-bound path.
    adj_buffer_count: optional pipeline depth for the adjacency stream
      (pl.Buffered); leave None unless profiling shows exposed DMA.
    """
    if x.ndim == 2:
        x = x[None]
    if adj.ndim == 2:
        adj = adj[None]
    B = max(x.shape[0], adj.shape[0])
    if x.shape[0] != B:
        x = jnp.broadcast_to(x, (B,) + x.shape[1:])
    if adj.shape[0] != B:
        adj = jnp.broadcast_to(adj, (B,) + adj.shape[1:])
    _, N, F = x.shape
    C = weight.shape[1]
    Cp = _round_up(C, out_channel_multiple) if out_channel_multiple else C

    # Adjacency storage dtype (see docstring).
    if adj_storage_dtype is None:
        if jnp.issubdtype(adj.dtype, jnp.integer) or adj.dtype == jnp.bool_:
            adj_storage_dtype = jnp.int8
        else:
            adj_storage_dtype = jnp.bfloat16
    adj_s = adj.astype(adj_storage_dtype)
    adj_itemsize = jnp.dtype(adj_storage_dtype).itemsize

    loop_value = 2.0 if improved else 1.0
    x_bf = x.astype(jnp.bfloat16)
    if add_loop:
        # corr = loop_value - diag(adj) rides as one extra zero-weight bf16
        # column of x: lane-dense stream, no (B,N,1) block, no in-kernel
        # relayout.  Exact for {0,1} adjacencies.
        diag = jnp.diagonal(adj, axis1=-2, axis2=-1).astype(jnp.float32)
        corr_col = (loop_value - diag).astype(jnp.bfloat16)[..., None]
        x_in = jnp.concatenate([x_bf, corr_col], axis=-1)
    else:
        x_in = x_bf
    Fa = x_in.shape[-1]

    w_pad = jnp.zeros((Fa, Cp), jnp.bfloat16)
    w_pad = w_pad.at[:F, :C].set(weight.astype(jnp.bfloat16))
    b_pad = jnp.zeros((1, Cp), jnp.float32)
    if bias is not None:
        b_pad = b_pad.at[0, :C].set(bias.astype(jnp.float32))

    # Generation-aware VMEM sizing (128 MiB on v5e/v6e, 64 MiB per core on v7x).
    phys = _vmem_capacity_bytes()
    budget = int(0.70 * phys)
    hard_cap = int(0.90 * phys)
    ws = lambda t: _working_set_bytes(t, N, Fa, Cp, adj_itemsize)
    blk = lambda t: t * N * N * adj_itemsize

    if batch_tile is not None:
        tb = batch_tile
        assert B % tb == 0, "batch_tile must divide the batch size"
    else:
        tb = _pick_batch_tile(B, ws, blk, budget)
        if tb is None:
            # Even a single graph exceeds the comfortable budget: run TB=1
            # with the scoped-VMEM limit raised as far as is safe.
            # TODO(synk): node/row tiling grid axis (scaled activations held
            # in a VMEM scratch) for very large N -- required on v7x.
            tb = 1
            if ws(1) > hard_cap:
                raise ValueError(
                    f"DenseGCNConv Pallas kernel: a single graph with N={N} "
                    f"needs ~{ws(1) >> 20} MiB of VMEM per grid step but only "
                    f"~{hard_cap >> 20} MiB is available; node/row tiling is "
                    "not implemented yet.")
    vmem_limit = int(min(hard_cap, max(budget, int(1.25 * ws(tb)))))

    adj_spec_kwargs = {}
    if adj_buffer_count is not None:
        adj_spec_kwargs["pipeline_mode"] = pl.Buffered(adj_buffer_count)
    adj_spec = pl.BlockSpec((tb, N, N), lambda b: (b, 0, 0), **adj_spec_kwargs)

    out_padded = pl.pallas_call(
        functools.partial(_gcn_kernel, add_loop=add_loop),
        out_shape=jax.ShapeDtypeStruct((B, N, Cp), jnp.float32),
        grid_spec=pltpu.PrefetchScalarGridSpec(
            num_scalar_prefetch=0,
            grid=(B // tb,),
            in_specs=[
                pl.BlockSpec((tb, N, Fa), lambda b: (b, 0, 0)),  # x (+corr col)
                adj_spec,                                        # adjacency
                pl.BlockSpec((Fa, Cp), lambda b: (0, 0)),        # W, resident
                pl.BlockSpec((1, Cp), lambda b: (0, 0)),         # bias, resident
            ],
            out_specs=pl.BlockSpec((tb, N, Cp), lambda b: (b, 0, 0)),
        ),
        compiler_params=pltpu.CompilerParams(
            dimension_semantics=("parallel",),
            vmem_limit_bytes=vmem_limit,
        ),
    )(x_in, adj_s, w_pad, b_pad)

    out = out_padded[..., :C] if Cp != C else out_padded
    if mask is not None:
        out = out * mask.reshape(B, N, 1).astype(out.dtype)
    return out


# --------------------------------------------------------------------------
# Reference + demo
# --------------------------------------------------------------------------
def _xavier_uniform(key, fan_in, fan_out, dtype=jnp.float32):
    bound = math.sqrt(6.0 / (fan_in + fan_out))
    return jax.random.uniform(key, (fan_in, fan_out), dtype=dtype,
                              minval=-bound, maxval=bound)


def _reference(x, adj, weight, bias, add_loop=True, improved=False, mask=None):
    x = x.astype(jnp.float32)
    adj = adj.astype(jnp.float32)
    if x.ndim == 2:
        x = x[None]
    if adj.ndim == 2:
        adj = adj[None]
    B, N, _ = adj.shape
    if add_loop:
        idx = jnp.arange(N)
        adj = adj.at[:, idx, idx].set(2.0 if improved else 1.0)
    out = jnp.matmul(x, weight.astype(jnp.float32))
    deg_inv_sqrt = jnp.maximum(adj.sum(-1), 1.0) ** -0.5
    adj_n = deg_inv_sqrt[:, :, None] * adj * deg_inv_sqrt[:, None, :]
    out = jnp.matmul(adj_n, out) + bias.astype(jnp.float32)
    if mask is not None:
        out = out * mask.reshape(B, N, 1).astype(out.dtype)
    return out


if __name__ == "__main__":
    key = jax.random.PRNGKey(0)
    k_x, k_adj, k_w = jax.random.split(key, 3)

    B, N, F, C = 4, 16, 16, 32

    # bf16-representable inputs so the f32 reference isolates the kernel's own
    # (tiny) internal rounding from input quantisation.
    x = jax.random.normal(k_x, (B, N, F), dtype=jnp.float32)
    x = x.astype(jnp.bfloat16).astype(jnp.float32)
    adj = (jax.random.uniform(k_adj, (B, N, N)) > 0.7).astype(jnp.float32)
    weight = _xavier_uniform(k_w, F, C).astype(jnp.bfloat16).astype(jnp.float32)
    bias = jnp.zeros((C,), dtype=jnp.float32)

    ref = _reference(x, adj, weight, bias)

    # Default path: binary adjacency streamed as int8 (exact), unpadded C.
    out = dense_gcn_conv(x, adj, weight, bias, adj_storage_dtype=jnp.int8)
    out = jax.block_until_ready(out)
    assert out.shape == (B, N, C)
    err = float(jnp.max(jnp.abs(out - ref)))
    assert jnp.allclose(out, ref, atol=3e-2, rtol=3e-2), f"max err {err}"

    # Lane/MXU-padded path (C -> 128) also compiles and matches.
    out2 = dense_gcn_conv(x, adj, weight, bias, adj_storage_dtype=jnp.int8,
                          out_channel_multiple=128)
    out2 = jax.block_until_ready(out2)
    err2 = float(jnp.max(jnp.abs(out2 - ref)))
    assert out2.shape == (B, N, C)
    assert jnp.allclose(out2, ref, atol=3e-2, rtol=3e-2), f"max err {err2}"

    print("KERNEL_OK")
</pallas_src>

<mosaic_0001>
module attributes {stable_mosaic.version = 11 : i64} {
  func.func @_gcn_kernel(%arg0: i32, %arg1: memref<2x16x17xbf16, #tpu.memory_space<vmem>>, %arg2: memref<2x16x16xi8, #tpu.memory_space<vmem>>, %arg3: memref<17x32xbf16, #tpu.memory_space<vmem>>, %arg4: memref<1x32xf32, #tpu.memory_space<vmem>>, %arg5: memref<2x16x32xf32, #tpu.memory_space<vmem>>) attributes {dimension_semantics = [#tpu.dimension_semantics<parallel>], iteration_bounds = array<i64: 2>, scalar_prefetch = 0 : i64, scratch_operands = 0 : i64, tpu.core_type = #tpu.core_type<tc>, window_params = [{transform_indices = @transform_0, window_bounds = array<i64: 2, 16, 17>}, {transform_indices = @transform_1, window_bounds = array<i64: 2, 16, 16>}, {pipeline_mode = #tpu.pipeline_mode<synchronous>, transform_indices = @transform_2, window_bounds = array<i64: 17, 32>}, {pipeline_mode = #tpu.pipeline_mode<synchronous>, transform_indices = @transform_3, window_bounds = array<i64: 1, 32>}, {transform_indices = @transform_4, window_bounds = array<i64: 2, 16, 32>}]} {
    %c0 = arith.constant 0 : index
    %c0_0 = arith.constant 0 : index
    %c0_1 = arith.constant 0 : index
    %0 = vector.load %arg1[%c0, %c0_0, %c0_1] : memref<2x16x17xbf16, #tpu.memory_space<vmem>>, vector<2x16x17xbf16>
    %c0_2 = arith.constant 0 : index
    %c0_3 = arith.constant 0 : index
    %c0_4 = arith.constant 0 : index
    %1 = vector.load %arg2[%c0_2, %c0_3, %c0_4] : memref<2x16x16xi8, #tpu.memory_space<vmem>>, vector<2x16x16xi8>
    %2 = arith.sitofp %1 : vector<2x16x16xi8> to vector<2x16x16xbf16>
    %3 = vector.shape_cast %0 : vector<2x16x17xbf16> to vector<32x17xbf16>
    %c0_5 = arith.constant 0 : index
    %c0_6 = arith.constant 0 : index
    %4 = vector.load %arg3[%c0_5, %c0_6] : memref<17x32xbf16, #tpu.memory_space<vmem>>, vector<17x32xbf16>
    %cst = arith.constant dense<0.000000e+00> : vector<32x32xf32>
    %5 = tpu.matmul %3, %4, %cst {dimension_numbers = #tpu.dot_dimension_numbers<[1], [0], [0], [1], [0, 0, 1, 1], [], []>} : vector<32x17xbf16>, vector<17x32xbf16>, vector<32x32xf32> -> vector<32x32xf32>
    %6 = vector.shape_cast %5 : vector<32x32xf32> to vector<2x16x32xf32>
    %cst_7 = arith.constant 1.000000e+00 : bf16
    %7 = vector.broadcast %cst_7 : bf16 to vector<16x1xbf16>
    %8 = vector.shape_cast %2 : vector<2x16x16xbf16> to vector<32x16xbf16>
    %cst_8 = arith.constant dense<0.000000e+00> : vector<32x1xf32>
    %9 = tpu.matmul %8, %7, %cst_8 {dimension_numbers = #tpu.dot_dimension_numbers<[1], [0], [0], [1], [0, 0, 1, 1], [], []>} : vector<32x16xbf16>, vector<16x1xbf16>, vector<32x1xf32> -> vector<32x1xf32>
    %10 = vector.shape_cast %9 : vector<32x1xf32> to vector<2x16x1xf32>
    %11 = vector.extract_strided_slice %0 {offsets = [0, 0, 16], sizes = [2, 16, 1], strides = [1, 1, 1]} : vector<2x16x17xbf16> to vector<2x16x1xbf16>
    %12 = arith.extf %11 : vector<2x16x1xbf16> to vector<2x16x1xf32>
    %13 = arith.addf %10, %12 : vector<2x16x1xf32>
    %cst_9 = arith.constant 1.000000e+00 : f32
    %14 = vector.broadcast %cst_9 : f32 to vector<2x16x1xf32>
    %15 = arith.maximumf %13, %14 : vector<2x16x1xf32>
    %16 = math.rsqrt %15 : vector<2x16x1xf32>
    %17 = vector.broadcast %16 : vector<2x16x1xf32> to vector<2x16x32xf32>
    %18 = arith.mulf %17, %6 : vector<2x16x32xf32>
    %19 = arith.truncf %18 : vector<2x16x32xf32> to vector<2x16x32xbf16>
    "tpu.trace_start"() <{level = 10 : i32, message = "bij,bjc->bic"}> : () -> ()
    %cst_10 = arith.constant dense<0.000000e+00> : vector<2x16x32xf32>
    %20 = tpu.matmul %2, %19, %cst_10 {dimension_numbers = #tpu.dot_dimension_numbers<[2], [1], [1], [2], [0, 0, 0, 1, 1, 2], [0], [0]>} : vector<2x16x16xbf16>, vector<2x16x32xbf16>, vector<2x16x32xf32> -> vector<2x16x32xf32>
    "tpu.trace_stop"() : () -> ()
    %21 = arith.extf %19 : vector<2x16x32xbf16> to vector<2x16x32xf32>
    %22 = vector.broadcast %12 : vector<2x16x1xf32> to vector<2x16x32xf32>
    %23 = arith.mulf %22, %21 : vector<2x16x32xf32>
    %24 = arith.addf %20, %23 : vector<2x16x32xf32>
    %25 = vector.broadcast %16 : vector<2x16x1xf32> to vector<2x16x32xf32>
    %26 = arith.mulf %25, %24 : vector<2x16x32xf32>
    %c0_11 = arith.constant 0 : index
    %c0_12 = arith.constant 0 : index
    %27 = vector.load %arg4[%c0_11, %c0_12] : memref<1x32xf32, #tpu.memory_space<vmem>>, vector<1x32xf32>
    %28 = vector.shape_cast %27 : vector<1x32xf32> to vector<1x1x32xf32>
    %29 = vector.broadcast %28 : vector<1x1x32xf32> to vector<2x16x32xf32>
    %30 = arith.addf %26, %29 : vector<2x16x32xf32>
    %c0_13 = arith.constant 0 : index
    %c0_14 = arith.constant 0 : index
    %c0_15 = arith.constant 0 : index
    %31 = vector.load %arg5[%c0_13, %c0_14, %c0_15] : memref<2x16x32xf32, #tpu.memory_space<vmem>>, vector<2x16x32xf32>
    tpu.vector_store %arg5[%c0_13, %c0_14, %c0_15], %30 {strides = array<i32>} : memref<2x16x32xf32, #tpu.memory_space<vmem>>, vector<2x16x32xf32>,
    return
  }
  func.func @transform_0(%arg0: i32) -> (i32, i32, i32) {
    %c0_i32 = arith.constant 0 : i32
    %c0_i32_0 = arith.constant 0 : i32
    %c0_i32_1 = arith.constant 0 : i32
    return %arg0, %c0_i32, %c0_i32_0 : i32, i32, i32
  }
  func.func @transform_1(%arg0: i32) -> (i32, i32, i32) {
    %c0_i32 = arith.constant 0 : i32
    %c0_i32_0 = arith.constant 0 : i32
    %c0_i32_1 = arith.constant 0 : i32
    return %arg0, %c0_i32, %c0_i32_0 : i32, i32, i32
  }
  func.func @transform_2(%arg0: i32) -> (i32, i32) {
    %c0_i32 = arith.constant 0 : i32
    %c0_i32_0 = arith.constant 0 : i32
    %c0_i32_1 = arith.constant 0 : i32
    return %c0_i32, %c0_i32_0 : i32, i32
  }
  func.func @transform_3(%arg0: i32) -> (i32, i32) {
    %c0_i32 = arith.constant 0 : i32
    %c0_i32_0 = arith.constant 0 : i32
    %c0_i32_1 = arith.constant 0 : i32
    return %c0_i32, %c0_i32_0 : i32, i32
  }
  func.func @transform_4(%arg0: i32) -> (i32, i32, i32) {
    %c0_i32 = arith.constant 0 : i32
    %c0_i32_0 = arith.constant 0 : i32
    %c0_i32_1 = arith.constant 0 : i32
    return %arg0, %c0_i32, %c0_i32_0 : i32, i32, i32
  }
}

</mosaic_0001>

<llo_original>
// kernel: tpu_custom_call.1
$region0: #{tpu_custom_call.1}
  #allocation0 [shape = 'u32[]', space=smem, size = 0x4, offset = 0x4, fixed_abs, tag = 'smem constant byte address 0x4 - core index']
  #allocation1 [shape = 'u32[144,128]{1,0:T(1,128)}', space=vmem, size = 0x12000, scoped, tag = 'internal scratch']
  %s0 = inlined_call_operand.hbm [shape: bf16[4,16,17], index: 0, kind: input, shape index: {}]
  %s1 = inlined_call_operand.hbm [shape: s8[4,16,16], index: 1, kind: input, shape index: {}]
  %s2 = inlined_call_operand.hbm [shape: bf16[17,32], index: 2, kind: input, shape index: {}]
  %s3 = inlined_call_operand.vmem [shape: f32[1,32], index: 3, kind: input, shape index: {}]
  %s4 = inlined_call_operand.hbm [shape: f32[4,16,32], index: 4, kind: output, shape index: {}]
  %s5 = sld [smem:[#allocation0]]
  $region61: #{tpu_custom_call.1} parent=0
    _
  %s7 = ssub.s32 1, %s5
  %s8 = scalar_select 0, %s7, %s5
  $region1: #{tpu_custom_call.1} parent=0
    #allocation2 [shape = 'u8[16384]{0}', space=vmem, size = 0x4000, scoped, tag = 'input window, operand 0']
    #allocation3 [shape = 's32[2]{0}', space=sflag, size = 0x8, scoped, tag = 'scoped memory for tpu_custom_call.1']
    #allocation4 [shape = 's32[2]{0}', space=sflag, size = 0x8, scoped, tag = 'scoped memory for tpu_custom_call.1']
    #allocation5 [shape = 'u8[8192]{0}', space=vmem, size = 0x2000, scoped, tag = 'input window, operand 1']
    #allocation6 [shape = 's32[2]{0}', space=sflag, size = 0x8, scoped, tag = 'scoped memory for tpu_custom_call.1']
    #allocation7 [shape = 'u8[6144]{0}', space=vmem, size = 0x1800, scoped, tag = 'input window, operand 2, single buffered']
    #allocation8 [shape = 'u8[32768]{0}', space=vmem, size = 0x8000, scoped, tag = 'output window, operand 0']
    %9 = vsyncpa [#allocation3], 0
    %s10 = scalar_lea.sflag [#allocation3], 1
    %11 = vsyncpa %s10, 0
    %12 = vsyncpa [#allocation6], 0
    %s13 = scalar_lea.sflag [#allocation6], 1
    %14 = vsyncpa %s13, 0
    %15 = vsyncpa [#allocation4], 0
    %s16 = scalar_lea.sflag [#allocation4], 1
    %17 = vsyncpa %s16, 0
    loop: start=0, step=1, limit=4
    $region2: #{tpu_custom_call.1} parent=1 // loop_pre_header
      _
    $region3: #{tpu_custom_call.1} parent=1 // loop_header
      %s19 = sphi 0, %s23
      %p20 = scmp.ge.s32.totalorder %s19, 4
      %s29 = sphi 0, %s31
      %s32 = sphi 0, %s29
      %s33 = sphi 0, %s32
      %s49 = sphi 0, %s33
      %s55 = sphi 0, %s57
      %s58 = sphi 0, %s55
      %s59 = sphi 0, %s58
      %s75 = sphi 0, %s59
      %s79 = sphi 0, %s79
      %s81 = sphi 0, %s79
      %s82 = sphi 0, %s81
      %s96 = sphi 0, %s82
      %s100 = sphi 0, %s100
      %s102 = sphi 0, %s100
      %s103 = sphi 0, %s102
      %s117 = sphi 0, %s103
      %s123 = sphi 0, %s125
      %s126 = sphi 0, %s123
      %s127 = sphi 0, %s126
      %s143 = sphi 0, %s127
    $region4: #{tpu_custom_call.1} parent=1 // loop_header_branch
      %22 = sbr.rel (%p20) target = $region8
    $region5: #{tpu_custom_call.1} parent=1 // loop_body
      %s24 = ssub.s32 %s19, 1
      %s25 = ssub.s32 %s19, 2
      %s26 = sadd.s32 %s19, 1
      %s27 = ssub.s32 %s19, %s26
      %p28 = scmp.eq.s32.totalorder %s27, 0
      %s30 = sadd.s32 %s29, 1
      %s31 = scalar_select %p28, %s29, %s30
      %p34 = pneg %p28
      %p35 = scmp.eq.s32.totalorder %s19, 1
      %p36 = por %p34, %p35
      %p37 = scmp.ne.s32.totalorder %s29, %s32
      %p38 = scmp.eq.s32.totalorder %s19, 0
      %p39 = por %p37, %p38
      %p40 = scmp.ne.s32.totalorder %s29, %s32
      %p41 = scmp.eq.s32.totalorder %s24, 1
      %p42 = por %p40, %p41
      %p43 = scmp.ne.s32.totalorder %s32, %s33
      %p44 = scmp.eq.s32.totalorder %s24, 0
      %p45 = por %p43, %p44
      %p46 = scmp.ne.s32.totalorder %s32, %s33
      %p47 = scmp.eq.s32.totalorder %s25, 1
      %p48 = por %p46, %p47
      %p50 = scmp.ne.s32.totalorder %s33, %s49
      %p51 = scmp.eq.s32.totalorder %s25, 0
      %p52 = por %p50, %p51
      %s53 = ssub.s32 %s19, %s26
      %p54 = scmp.eq.s32.totalorder %s53, 0
      %s56 = sadd.s32 %s55, 1
      %s57 = scalar_select %p54, %s55, %s56
      %p60 = pneg %p54
      %p61 = scmp.eq.s32.totalorder %s19, 1
      %p62 = por %p60, %p61
      %p63 = scmp.ne.s32.totalorder %s55, %s58
      %p64 = scmp.eq.s32.totalorder %s19, 0
      %p65 = por %p63, %p64
      %p66 = scmp.ne.s32.totalorder %s55, %s58
      %p67 = scmp.eq.s32.totalorder %s24, 1
      %p68 = por %p66, %p67
      %p69 = scmp.ne.s32.totalorder %s58, %s59
      %p70 = scmp.eq.s32.totalorder %s24, 0
      %p71 = por %p69, %p70
      %p72 = scmp.ne.s32.totalorder %s58, %s59
      %p73 = scmp.eq.s32.totalorder %s25, 1
      %p74 = por %p72, %p73
      %p76 = scmp.ne.s32.totalorder %s59, %s75
      %p77 = scmp.eq.s32.totalorder %s25, 0
      %p78 = por %p76, %p77
      %s80 = sadd.s32 %s79, 1
      %p83 = scmp.eq.s32.totalorder %s19, 1
      %p84 = scmp.ne.s32.totalorder %s79, %s81
      %p85 = scmp.eq.s32.totalorder %s19, 0
      %p86 = por %p84, %p85
      %p87 = scmp.ne.s32.totalorder %s79, %s81
      %p88 = scmp.eq.s32.totalorder %s24, 1
      %p89 = por %p87, %p88
      %p90 = scmp.ne.s32.totalorder %s81, %s82
      %p91 = scmp.eq.s32.totalorder %s24, 0
      %p92 = por %p90, %p91
      %p93 = scmp.ne.s32.totalorder %s81, %s82
      %p94 = scmp.eq.s32.totalorder %s25, 1
      %p95 = por %p93, %p94
      %p97 = scmp.ne.s32.totalorder %s82, %s96
      %p98 = scmp.eq.s32.totalorder %s25, 0
      %p99 = por %p97, %p98
      %s101 = sadd.s32 %s100, 1
      %p104 = scmp.eq.s32.totalorder %s19, 1
      %p105 = scmp.ne.s32.totalorder %s100, %s102
      %p106 = scmp.eq.s32.totalorder %s19, 0
      %p107 = por %p105, %p106
      %p108 = scmp.ne.s32.totalorder %s100, %s102
      %p109 = scmp.eq.s32.totalorder %s24, 1
      %p110 = por %p108, %p109
      %p111 = scmp.ne.s32.totalorder %s102, %s103
      %p112 = scmp.eq.s32.totalorder %s24, 0
      %p113 = por %p111, %p112
      %p114 = scmp.ne.s32.totalorder %s102, %s103
      %p115 = scmp.eq.s32.totalorder %s25, 1
      %p116 = por %p114, %p115
      %p118 = scmp.ne.s32.totalorder %s103, %s117
      %p119 = scmp.eq.s32.totalorder %s25, 0
      %p120 = por %p118, %p119
      %s121 = ssub.s32 %s19, %s26
      %p122 = scmp.eq.s32.totalorder %s121, 0
      %s124 = sadd.s32 %s123, 1
      %s125 = scalar_select %p122, %s123, %s124
      %p128 = pneg %p122
      %p129 = scmp.eq.s32.totalorder %s19, 1
      %p130 = por %p128, %p129
      %p131 = scmp.ne.s32.totalorder %s123, %s126
      %p132 = scmp.eq.s32.totalorder %s19, 0
      %p133 = por %p131, %p132
      %p134 = scmp.ne.s32.totalorder %s123, %s126
      %p135 = scmp.eq.s32.totalorder %s24, 1
      %p136 = por %p134, %p135
      %p137 = scmp.ne.s32.totalorder %s126, %s127
      %p138 = scmp.eq.s32.totalorder %s24, 0
      %p139 = por %p137, %p138
      %p140 = scmp.ne.s32.totalorder %s126, %s127
      %p141 = scmp.eq.s32.totalorder %s25, 1
      %p142 = por %p140, %p141
      %p144 = scmp.ne.s32.totalorder %s127, %s143
      %p145 = scmp.eq.s32.totalorder %s25, 0
      %p146 = por %p144, %p145
      %p147 = scmp.le.s32.totalorder 1, %s19
      %p148 = scmp.lt.s32.totalorder %s19, 3
      %p149 = pnand %p147, %p148
      %p150 = pneg %p149
      // Predicated region
      $region9: #{tpu_custom_call.1} parent=5 // pred_check
        _
      $region10: #{tpu_custom_call.1} parent=5 // pred_check_branch
        %152 = sbr.rel (%p149) target = $region12
      $region11: #{tpu_custom_call.1} parent=5 // pred_region
        %s153 = ssub.s32 %s19, 1
        // Predicated region
        $region13: #{tpu_custom_call.1} parent=11 // pred_check
          %p154 = pneg %p92
        $region14: #{tpu_custom_call.1} parent=11 // pred_check_branch
          %156 = sbr.rel (%p154) target = $region16
        $region15: #{tpu_custom_call.1} parent=11 // pred_region
          %s158 = ssub.s32 192, 192
          %159 = vsyncadd [#allocation6], %s158
          %s160 = sshll.u32 [#allocation7], 4
          %s161 = int_to_ptr.vmem [resolvable:$true] %s160
          %166 = dma.hbm_to_vmem [thread:$0]  %s2, 192, %s161, [#allocation6], 64, 64, 4
        $region16: #{tpu_custom_call.1} parent=11 // pred_fallthru
          _
        // Predicated region
        $region17: #{tpu_custom_call.1} parent=11 // pred_check
          %p167 = pneg %p113
        $region18: #{tpu_custom_call.1} parent=11 // pred_check_branch
          %169 = sbr.rel (%p167) target = $region20
        $region19: #{tpu_custom_call.1} parent=11 // pred_region
          _
        $region20: #{tpu_custom_call.1} parent=11 // pred_fallthru
          _
      $region12: #{tpu_custom_call.1} parent=5 // pred_fallthru
        _
      %p170 = scmp.lt.s32.totalorder %s19, 2
      // Predicated region
      $region21: #{tpu_custom_call.1} parent=5 // pred_check
        %p171 = pneg %p170
      $region22: #{tpu_custom_call.1} parent=5 // pred_check_branch
        %173 = sbr.rel (%p171) target = $region24
      $region23: #{tpu_custom_call.1} parent=5 // pred_region
        // Predicated region
        $region25: #{tpu_custom_call.1} parent=23 // pred_check
          %p174 = pneg %p39
        $region26: #{tpu_custom_call.1} parent=23 // pred_check_branch
          %176 = sbr.rel (%p174) target = $region28
        $region27: #{tpu_custom_call.1} parent=23 // pred_region
          %s177 = sand.u32 %s29, 1
          %s178 = scalar_lea.sflag [#allocation3], %s177
          %s179 = sand.u32 %s29, 1
          %s180 = smul.addr %s179, 16
          %s181 = scalar_lea.vmem [#allocation2], %s180
          %s182 = smul.u32 2, %s19
          %s184 = ssub.s32 256, 256
          %185 = vsyncadd %s178, %s184
          %s186 = smul.addr %s182, 2
          %s187 = smul.addr %s186, 64
          %s188 = scalar_lea.hbm %s0, %s187
          %s189 = sshll.u32 %s181, 4
          %s190 = int_to_ptr.vmem [resolvable:$true] %s189
          %195 = dma.hbm_to_vmem [thread:$0]  %s188, 256, %s190, %s178, 64, 64, 4
        $region28: #{tpu_custom_call.1} parent=23 // pred_fallthru
          _
        // Predicated region
        $region29: #{tpu_custom_call.1} parent=23 // pred_check
          %p196 = pneg %p65
        $region30: #{tpu_custom_call.1} parent=23 // pred_check_branch
          %198 = sbr.rel (%p196) target = $region32
        $region31: #{tpu_custom_call.1} parent=23 // pred_region
          %s199 = sand.u32 %s19, 1
          %s200 = scalar_lea.sflag [#allocation6], %s199
          %s201 = sand.u32 %s55, 1
          %s202 = smul.addr %s201, 8
          %s203 = scalar_lea.vmem [#allocation5], %s202
          %s204 = smul.u32 2, %s19
          %s206 = ssub.s32 128, 128
          %207 = vsyncadd %s200, %s206
          %s208 = smul.addr %s204, 2
          %s209 = smul.addr %s208, 32
          %s210 = scalar_lea.hbm %s1, %s209
          %s211 = sshll.u32 %s203, 4
          %s212 = int_to_ptr.vmem [resolvable:$true] %s211
          %217 = dma.hbm_to_vmem [thread:$0]  %s210, 128, %s212, %s200, 32, 32, 2
        $region32: #{tpu_custom_call.1} parent=23 // pred_fallthru
          _
      $region24: #{tpu_custom_call.1} parent=5 // pred_fallthru
        _
      %p218 = scmp.le.s32.totalorder 1, %s19
      %p219 = scmp.lt.s32.totalorder %s19, 3
      %p220 = pnand %p218, %p219
      %p221 = pneg %p220
      // Predicated region
      $region33: #{tpu_custom_call.1} parent=5 // pred_check
        _
      $region34: #{tpu_custom_call.1} parent=5 // pred_check_branch
        %223 = sbr.rel (%p220) target = $region36
      $region35: #{tpu_custom_call.1} parent=5 // pred_region
        %s224 = ssub.s32 %s19, 1
        %s225 = sand.u32 %s32, 1
        %s226 = scalar_lea.sflag [#allocation3], %s225
        %s227 = sand.u32 %s32, 1
        %s228 = smul.addr %s227, 16
        %s229 = scalar_lea.vmem [#allocation2], %s228
        // Predicated region
        $region37: #{tpu_custom_call.1} parent=35 // pred_check
          %p230 = pneg %p45
        $region38: #{tpu_custom_call.1} parent=35 // pred_check_branch
          %232 = sbr.rel (%p230) target = $region40
        $region39: #{tpu_custom_call.1} parent=35 // pred_region
          %233 = dma.done %s226, 256
        $region40: #{tpu_custom_call.1} parent=35 // pred_fallthru
          _
        %s234 = sand.u32 %s24, 1
        %s235 = scalar_lea.sflag [#allocation6], %s234
        %s236 = sand.u32 %s58, 1
        %s237 = smul.addr %s236, 8
        %s238 = scalar_lea.vmem [#allocation5], %s237
        // Predicated region
        $region41: #{tpu_custom_call.1} parent=35 // pred_check
          %p239 = pneg %p71
        $region42: #{tpu_custom_call.1} parent=35 // pred_check_branch
          %241 = sbr.rel (%p239) target = $region44
        $region43: #{tpu_custom_call.1} parent=35 // pred_region
          %242 = dma.done %s235, 128
        $region44: #{tpu_custom_call.1} parent=35 // pred_fallthru
          _
        // Predicated region
        $region45: #{tpu_custom_call.1} parent=35 // pred_check
          %p243 = pneg %p92
        $region46: #{tpu_custom_call.1} parent=35 // pred_check_branch
          %245 = sbr.rel (%p243) target = $region48
        $region47: #{tpu_custom_call.1} parent=35 // pred_region
          %246 = dma.done [#allocation6], 192
        $region48: #{tpu_custom_call.1} parent=35 // pred_fallthru
          _
        %s247 = sand.u32 %s32, 1
        %s248 = scalar_lea.sflag [#allocation3], %s247
        %s249 = sand.u32 %s32, 1
        %s250 = smul.addr %s249, 16
        %s251 = scalar_lea.vmem [#allocation2], %s250
        %p252 = pneg %p45
        %p253 = pneg %p42
        %s254 = sand.u32 %s24, 1
        %s255 = scalar_lea.sflag [#allocation6], %s254
        %s256 = sand.u32 %s58, 1
        %s257 = smul.addr %s256, 8
        %s258 = scalar_lea.vmem [#allocation5], %s257
        %p259 = pneg %p71
        %p260 = pneg %p68
        %p261 = pneg %p92
        %p262 = pneg %p89
        %p263 = pneg %p113
        %p264 = pneg %p110
        %p265 = pneg %p139
        %p266 = pneg %p136
        %s267 = sand.u32 %s126, 1
        %s268 = scalar_lea.sflag [#allocation4], %s267
        %s269 = sand.u32 %s126, 1
        %s270 = smul.addr %s269, 32
        %s271 = scalar_lea.vmem [#allocation8], %s270
        %s272 = smul.u32 2, %s24
        %s273 = smul.u32 2, %s24
        %s274 = smul.u32 2, %s24
        %v277 = vld [vmem:[%s229] sm:$0xf]
        %v278 = vld [vmem:[%s229 + $0x4] sm:$0xf]
        %v279 = vld [vmem:[%s229 + $0x8] sm:$0xf]
        %v280 = vld [vmem:[%s229 + $0xc] sm:$0xf]
        %v281 = vld [vmem:[%s238] sm:$0x3]
        %v282 = vld [vmem:[%s238 + $0x2] sm:$0x3]
        %v283 = vld [vmem:[%s238 + $0x4] sm:$0x3]
        %v284 = vld [vmem:[%s238 + $0x6] sm:$0x3]
        %v285 = vunpack.c.l.s8.bf16 %v281
        %v286 = vunpack.c.l.s8.bf16 %v282
        %v287 = vunpack.c.l.s8.bf16 %v283
        %v288 = vunpack.c.l.s8.bf16 %v284
        %v289 = vld [vmem:[#allocation7] sm:$0xf]
        %v290 = vld [vmem:[#allocation7 + $0x4] sm:$0xf]
        %v291 = vld [vmem:[#allocation7 + $0x8] sm:$0x1]
        %v296 = vunpack.c.l.b16 %v277
        %v297 = vunpack.c.l.b16 %v278
        %v298 = vunpack.c.l.b16 %v279
        %v299 = vunpack.c.l.b16 %v280
        %v300 = vpack.c.b16 %v297, %v296
        %v301 = vpack.c.b16 %v299, %v298
        %v305 = vunpack.c.l.b16 %v289
        %v306 = vunpack.c.l.b16 %v290
        %v307 = vunpack.c.l.b16 %v291
        %v308 = vpack.c.b16 %v306, %v305
        %v309 = vpack.c.b16 %v307, %v307
        %vm311 = vcmask 138240
        %v313 = vsel %vm311, %v300, 0
        %v316 = vsel %vm311, %v301, 0
        %vm318 = vcmask 1040384
        %v319 = vsel 0, 4294967295, 65535
        %v320 = vsel %vm318, %v319, 0
        %v322 = vand.u32 %v309, %v320
        %324 = vmatprep.subr.bf16.mxu0 0
        %325 = vmatpush1.bf16.msra.mxu0 0
        %326 = vmatprep.subr.bf16.mxu0 0
        %327 = vmatpush1.bf16.msra.mxu0 0
        %328 = vmatprep.subr.bf16.mxu0 0
        %329 = vmatpush1.bf16.msra.mxu0 0
        %330 = vmatprep.subr.bf16.mxu0 0
        %331 = vmatpush1.bf16.msra.mxu0 0
        %332 = vmatprep.subr.bf16.mxu0 0
        %333 = vmatpush1.bf16.msra.mxu0 0
        %334 = vmatprep.subr.bf16.mxu0 0
        %335 = vmatpush1.bf16.msra.mxu0 0
        %336 = vmatprep.subr.bf16.mxu0 0
        %337 = vmatpush1.bf16.msra.mxu0 %v322
        %338 = vmatprep.subr.bf16.mxu0 0
        %339 = vmatpush1.bf16.msra.mxu0 %v308
        %340 = vmatprep.subr.bf16.mxu0 0
        %341 = vmatpush2.bf16.msra.mxu0 0
        %342 = vmatprep.subr.bf16.mxu0 0
        %343 = vmatpush2.bf16.msra.mxu0 0
        %344 = vmatprep.subr.bf16.mxu0 0
        %345 = vmatpush2.bf16.msra.mxu0 0
        %346 = vmatprep.subr.bf16.mxu0 0
        %347 = vmatpush2.bf16.msra.mxu0 0
        %348 = vmatprep.subr.bf16.mxu0 0
        %349 = vmatpush2.bf16.msra.mxu0 0
        %350 = vmatprep.subr.bf16.mxu0 0
        %351 = vmatpush2.bf16.msra.mxu0 0
        %352 = vmatprep.subr.bf16.mxu0 0
        %353 = vmatpush2.bf16.msra.mxu0 0
        %354 = vmatprep.subr.bf16.mxu0 0
        %355 = vmatpush2.bf16.msra.mxu0 0
        %356 = vmatprep.mubr.bf16.mxu0 0
        %357 = vmatmul.mubr.bf16.gmra.mxu0 %v313
        %v358 = vpop.f32.mrf.mxu0
        %v359 = vadd.f32 0.0, %v358
        %v360 = vpop.f32.mrf.mxu0
        %v361 = vpop.f32.mrf.mxu0
        %v362 = vadd.f32 0.0, %v361
        %v363 = vpop.f32.mrf.mxu0
        %364 = vmatprep.mubr.bf16.mxu0 0
        %365 = vmatmul.mubr.bf16.gmra.mxu0 %v316
        %v366 = vpop.f32.mrf.mxu0
        %v367 = vadd.f32 0.0, %v366
        %v368 = vpop.f32.mrf.mxu0
        %v369 = vpop.f32.mrf.mxu0
        %v370 = vadd.f32 0.0, %v369
        %v371 = vpop.f32.mrf.mxu0
        %372 = vdwg.mxu0
        %v377 = vunpack.c.l.b16 %v285
        %v378 = vunpack.c.l.b16 %v286
        %v379 = vunpack.c.l.b16 %v287
        %v380 = vunpack.c.l.b16 %v288
        %v381 = vpack.c.b16 %v378, %v377
        %v382 = vpack.c.b16 %v380, %v379
        %vm383 = vcmask 130048
        %v385 = vsel %vm383, %v381, 0
        %v388 = vsel %vm383, %v382, 0
        %390 = vmatprep.subr.bf16.mxu0 0
        %391 = vmatpush1.bf16.msra.mxu0 0
        %392 = vmatprep.subr.bf16.mxu0 0
        %393 = vmatpush1.bf16.msra.mxu0 0
        %394 = vmatprep.subr.bf16.mxu0 0
        %395 = vmatpush1.bf16.msra.mxu0 0
        %396 = vmatprep.subr.bf16.mxu0 0
        %397 = vmatpush1.bf16.msra.mxu0 0
        %398 = vmatprep.subr.bf16.mxu0 0
        %399 = vmatpush1.bf16.msra.mxu0 0
        %400 = vmatprep.subr.bf16.mxu0 0
        %401 = vmatpush1.bf16.msra.mxu0 0
        %402 = vmatprep.subr.bf16.mxu0 0
        %403 = vmatpush1.bf16.msra.mxu0 0
        %404 = vmatprep.subr.bf16.mxu0 0
        %405 = vmatpush1.bf16.msra.mxu0 1065369472
        %406 = vmatprep.subr.bf16.mxu0 0
        %407 = vmatpush2.bf16.msra.mxu0 0
        %408 = vmatprep.subr.bf16.mxu0 0
        %409 = vmatpush2.bf16.msra.mxu0 0
        %410 = vmatprep.subr.bf16.mxu0 0
        %411 = vmatpush2.bf16.msra.mxu0 0
        %412 = vmatprep.subr.bf16.mxu0 0
        %413 = vmatpush2.bf16.msra.mxu0 0
        %414 = vmatprep.subr.bf16.mxu0 0
        %415 = vmatpush2.bf16.msra.mxu0 0
        %416 = vmatprep.subr.bf16.mxu0 0
        %417 = vmatpush2.bf16.msra.mxu0 0
        %418 = vmatprep.subr.bf16.mxu0 0
        %419 = vmatpush2.bf16.msra.mxu0 0
        %420 = vmatprep.subr.bf16.mxu0 0
        %421 = vmatpush2.bf16.msra.mxu0 0
        %422 = vmatprep.mubr.bf16.mxu0 0
        %423 = vmatmul.mubr.bf16.gmra.mxu0 %v385
        %v424 = vpop.f32.mrf.mxu0
        %v425 = vadd.f32 0.0, %v424
        %v426 = vpop.f32.mrf.mxu0
        %v427 = vpop.f32.mrf.mxu0
        %v428 = vadd.f32 0.0, %v427
        %v429 = vpop.f32.mrf.mxu0
        %430 = vmatprep.mubr.bf16.mxu0 0
        %431 = vmatmul.mubr.bf16.gmra.mxu0 %v388
        %v432 = vpop.f32.mrf.mxu0
        %v433 = vadd.f32 0.0, %v432
        %v434 = vpop.f32.mrf.mxu0
        %v435 = vpop.f32.mrf.mxu0
        %v436 = vadd.f32 0.0, %v435
        %v437 = vpop.f32.mrf.mxu0
        %438 = vdwg.mxu0
        %v439 = vunpack.c.l.bf16 %v277
        %v440 = vunpack.c.l.bf16 %v278
        %v441 = vunpack.c.l.bf16 %v279
        %v442 = vunpack.c.l.bf16 %v280
        %447 = vrot.lane.b32.xlu0 %v439, 112
        %v448 = vpop.permute.xlu0 %447
        %449 = vrot.lane.b32.xlu0 %v440, 112
        %v450 = vpop.permute.xlu0 %449
        %451 = vrot.lane.b32.xlu0 %v441, 112
        %v452 = vpop.permute.xlu0 %451
        %453 = vrot.lane.b32.xlu0 %v442, 112
        %v454 = vpop.permute.xlu0 %453
        %v459 = vadd.f32 %v425, %v448
        %v460 = vadd.f32 %v428, %v450
        %v461 = vadd.f32 %v433, %v452
        %v462 = vadd.f32 %v436, %v454
        %v463 = vmax.f32 %v459, 1.0
        %v464 = vmax.f32 %v460, 1.0
        %v465 = vmax.f32 %v461, 1.0
        %v466 = vmax.f32 %v462, 1.0
        %v467 = vrsqrt.pop %v463
        %v468 = vrsqrt.pop %v464
        %v469 = vrsqrt.pop %v465
        %v470 = vrsqrt.pop %v466
        %472 = vset.pattern.permute.xlu0 0
        %473 = vperm.xlu0 %472, %v467
        %v474 = vpop.permute.xlu0 %473
        %477 = vset.pattern.permute.xlu0 0
        %478 = vperm.xlu0 %477, %v468
        %v479 = vpop.permute.xlu0 %478
        %482 = vset.pattern.permute.xlu0 0
        %483 = vperm.xlu0 %482, %v469
        %v484 = vpop.permute.xlu0 %483
        %487 = vset.pattern.permute.xlu0 0
        %488 = vperm.xlu0 %487, %v470
        %v489 = vpop.permute.xlu0 %488
        %v491 = vmul.f32 %v474, %v359
        %v492 = vmul.f32 %v479, %v362
        %v493 = vmul.f32 %v484, %v367
        %v494 = vmul.f32 %v489, %v370
        %v495 = vpack.c.bf16 %v492, %v491
        %v496 = vpack.c.bf16 %v494, %v493
        %v497 = vunpack.c.l.bf16 %v495
        %v498 = vunpack.c.h.bf16 %v495
        %v499 = vunpack.c.l.bf16 %v496
        %v500 = vunpack.c.h.bf16 %v496
        %501 = vset.pattern.permute.xlu0 16
        %502 = vperm.xlu0 %501, %v439
        %v503 = vpop.permute.xlu0 %502
        %505 = vset.pattern.permute.xlu0 16
        %506 = vperm.xlu0 %505, %v440
        %v507 = vpop.permute.xlu0 %506
        %509 = vset.pattern.permute.xlu0 16
        %510 = vperm.xlu0 %509, %v441
        %v511 = vpop.permute.xlu0 %510
        %513 = vset.pattern.permute.xlu0 16
        %514 = vperm.xlu0 %513, %v442
        %v515 = vpop.permute.xlu0 %514
        %v517 = vmul.f32 %v503, %v497
        %v518 = vmul.f32 %v507, %v498
        %v519 = vmul.f32 %v511, %v499
        %v520 = vmul.f32 %v515, %v500
        %521 = vmatprep.subr.bf16.mxu0 0
        %522 = vmatpush1.bf16.msra.mxu0 0
        %523 = vmatprep.subr.bf16.mxu0 0
        %524 = vmatpush1.bf16.msra.mxu0 0
        %525 = vmatprep.subr.bf16.mxu0 0
        %526 = vmatpush1.bf16.msra.mxu0 0
        %527 = vmatprep.subr.bf16.mxu0 0
        %528 = vmatpush1.bf16.msra.mxu0 0
        %529 = vmatprep.subr.bf16.mxu0 0
        %530 = vmatpush1.bf16.msra.mxu0 0
        %531 = vmatprep.subr.bf16.mxu0 0
        %532 = vmatpush1.bf16.msra.mxu0 0
        %533 = vmatprep.subr.bf16.mxu0 0
        %534 = vmatpush1.bf16.msra.mxu0 0
        %535 = vmatprep.subr.bf16.mxu0 0
        %536 = vmatpush1.bf16.msra.mxu0 %v495
        %537 = vmatprep.subr.bf16.mxu0 0
        %538 = vmatpush2.bf16.msra.mxu0 0
        %539 = vmatprep.subr.bf16.mxu0 0
        %540 = vmatpush2.bf16.msra.mxu0 0
        %541 = vmatprep.subr.bf16.mxu0 0
        %542 = vmatpush2.bf16.msra.mxu0 0
        %543 = vmatprep.subr.bf16.mxu0 0
        %544 = vmatpush2.bf16.msra.mxu0 0
        %545 = vmatprep.subr.bf16.mxu0 0
        %546 = vmatpush2.bf16.msra.mxu0 0
        %547 = vmatprep.subr.bf16.mxu0 0
        %548 = vmatpush2.bf16.msra.mxu0 0
        %549 = vmatprep.subr.bf16.mxu0 0
        %550 = vmatpush2.bf16.msra.mxu0 0
        %551 = vmatprep.subr.bf16.mxu0 0
        %552 = vmatpush2.bf16.msra.mxu0 0
        %553 = vmatprep.mubr.bf16.mxu0 0
        %554 = vmatmul.mubr.bf16.gmra.mxu0 %v385
        %v555 = vpop.f32.mrf.mxu0
        %v556 = vadd.f32 %v517, %v555
        %v557 = vpop.f32.mrf.mxu0
        %v558 = vpop.f32.mrf.mxu0
        %v559 = vadd.f32 %v518, %v558
        %v560 = vpop.f32.mrf.mxu0
        %561 = vdwg.mxu0
        %562 = vmatprep.subr.bf16.mxu0 0
        %563 = vmatpush1.bf16.msra.mxu0 0
        %564 = vmatprep.subr.bf16.mxu0 0
        %565 = vmatpush1.bf16.msra.mxu0 0
        %566 = vmatprep.subr.bf16.mxu0 0
        %567 = vmatpush1.bf16.msra.mxu0 0
        %568 = vmatprep.subr.bf16.mxu0 0
        %569 = vmatpush1.bf16.msra.mxu0 0
        %570 = vmatprep.subr.bf16.mxu0 0
        %571 = vmatpush1.bf16.msra.mxu0 0
        %572 = vmatprep.subr.bf16.mxu0 0
        %573 = vmatpush1.bf16.msra.mxu0 0
        %574 = vmatprep.subr.bf16.mxu0 0
        %575 = vmatpush1.bf16.msra.mxu0 0
        %576 = vmatprep.subr.bf16.mxu0 0
        %577 = vmatpush1.bf16.msra.mxu0 %v496
        %578 = vmatprep.subr.bf16.mxu0 0
        %579 = vmatpush2.bf16.msra.mxu0 0
        %580 = vmatprep.subr.bf16.mxu0 0
        %581 = vmatpush2.bf16.msra.mxu0 0
        %582 = vmatprep.subr.bf16.mxu0 0
        %583 = vmatpush2.bf16.msra.mxu0 0
        %584 = vmatprep.subr.bf16.mxu0 0
        %585 = vmatpush2.bf16.msra.mxu0 0
        %586 = vmatprep.subr.bf16.mxu0 0
        %587 = vmatpush2.bf16.msra.mxu0 0
        %588 = vmatprep.subr.bf16.mxu0 0
        %589 = vmatpush2.bf16.msra.mxu0 0
        %590 = vmatprep.subr.bf16.mxu0 0
        %591 = vmatpush2.bf16.msra.mxu0 0
        %592 = vmatprep.subr.bf16.mxu0 0
        %593 = vmatpush2.bf16.msra.mxu0 0
        %594 = vmatprep.mubr.bf16.mxu0 0
        %595 = vmatmul.mubr.bf16.gmra.mxu0 %v388
        %v596 = vpop.f32.mrf.mxu0
        %v597 = vadd.f32 %v519, %v596
        %v598 = vpop.f32.mrf.mxu0
        %v599 = vpop.f32.mrf.mxu0
        %v600 = vadd.f32 %v520, %v599
        %v601 = vpop.f32.mrf.mxu0
        %602 = vdwg.mxu0
        %v603 = vmul.f32 %v474, %v556
        %v604 = vmul.f32 %v479, %v559
        %v605 = vmul.f32 %v484, %v597
        %v606 = vmul.f32 %v489, %v600
        %v607 = vld [vmem:[%s3] sm:$0x1]
        %v609 = vlaneseq
        %v610 = vshrl.u32 %v609, 7
        %v611 = vsub.s32 0, %v610
        %v612 = vrot.slane %v607, %v611
        %v614 = vadd.f32 %v603, %v612
        %v615 = vadd.f32 %v604, %v612
        %v616 = vadd.f32 %v605, %v612
        %v617 = vadd.f32 %v606, %v612
        %vm618 = vcmask 261120
        %619 = vst.msk [vmem:[%s271] sm:$0xff] %vm618, %v614
        %620 = vst.msk [vmem:[%s271 + $0x8] sm:$0xff] %vm618, %v615
        %621 = vst.msk [vmem:[%s271 + $0x10] sm:$0xff] %vm618, %v616
        %622 = vst.msk [vmem:[%s271 + $0x18] sm:$0xff] %vm618, %v617
        %s623 = sand.u32 %s126, 1
        %s624 = scalar_lea.sflag [#allocation4], %s623
        %s625 = sand.u32 %s126, 1
        %s626 = smul.addr %s625, 32
        %s627 = scalar_lea.vmem [#allocation8], %s626
        // Predicated region
        $region49: #{tpu_custom_call.1} parent=35 // pred_check
          %p628 = pneg %p136
        $region50: #{tpu_custom_call.1} parent=35 // pred_check_branch
          %630 = sbr.rel (%p628) target = $region52
        $region51: #{tpu_custom_call.1} parent=35 // pred_region
          %s631 = smul.u32 2, %s24
          %s633 = ssub.s32 512, 512
          %634 = vsyncadd %s624, %s633
          %s635 = smul.addr %s631, 2
          %s636 = smul.addr %s635, 128
          %s637 = scalar_lea.hbm %s4, %s636
          %s638 = sshll.u32 %s627, 4
          %s639 = int_to_ptr.vmem [resolvable:$true] %s638
          %644 = dma.vmem_to_hbm [thread:$0]  %s639, 512, %s637, %s624, 128, 128, 8
        $region52: #{tpu_custom_call.1} parent=35 // pred_fallthru
          _
      $region36: #{tpu_custom_call.1} parent=5 // pred_fallthru
        _
      %p645 = scmp.le.s32.totalorder 2, %s19
      // Predicated region
      $region53: #{tpu_custom_call.1} parent=5 // pred_check
        %p646 = pneg %p645
      $region54: #{tpu_custom_call.1} parent=5 // pred_check_branch
        %648 = sbr.rel (%p646) target = $region56
      $region55: #{tpu_custom_call.1} parent=5 // pred_region
        %s649 = ssub.s32 %s19, 2
        // Predicated region
        $region57: #{tpu_custom_call.1} parent=55 // pred_check
          %p650 = pneg %p142
        $region58: #{tpu_custom_call.1} parent=55 // pred_check_branch
          %652 = sbr.rel (%p650) target = $region60
        $region59: #{tpu_custom_call.1} parent=55 // pred_region
          %s653 = sand.u32 %s127, 1
          %s654 = scalar_lea.sflag [#allocation4], %s653
          %s655 = sand.u32 %s127, 1
          %s656 = smul.addr %s655, 32
          %s657 = scalar_lea.vmem [#allocation8], %s656
          %658 = dma.done %s654, 512
        $region60: #{tpu_custom_call.1} parent=55 // pred_fallthru
          _
      $region56: #{tpu_custom_call.1} parent=5 // pred_fallthru
        _
    $region6: #{tpu_custom_call.1} parent=1 // loop_footer
      %s23 = sadd.s32 1, %s19
    $region7: #{tpu_custom_call.1} parent=1 // loop_footer_branch
      %18 = sbr.rel target = $region3
    $region8: #{tpu_custom_call.1} parent=1 // loop_exit
      _
    %659 = vsyncpa [#allocation3], 1
    %s660 = scalar_lea.sflag [#allocation3], 1
    %661 = vsyncpa %s660, 1
    %662 = vsyncpa [#allocation6], 1
    %s663 = scalar_lea.sflag [#allocation6], 1
    %664 = vsyncpa %s663, 1
    %665 = vsyncpa [#allocation4], 1
    %s666 = scalar_lea.sflag [#allocation4], 1
    %667 = vsyncpa %s666, 1

</llo_original>
